<compile_context>
chip_gen: v6e
topology: v6e:2x2x1
jax: 0.10.0
libtpu: 0.0.40
codegen_flags: <defaults>
</compile_context>

<pallas_src>
import functools

import jax
import jax.numpy as jnp
from jax.experimental import pallas as pl
from jax.experimental.pallas import tpu as pltpu

NEG_SLOPE = 0.01 - 2.0  # = -1.99, exactly as in the PyTorch module
_LANES = 128


def _qrelu_kernel(x_ref, o_ref):
    x = x_ref[...]
    # NOTE: the slope is cast to the activation dtype (bf16: -1.9921875) before
    # the multiply; PyTorch does the multiply in fp32 opmath — ULP-level only.
    o_ref[...] = jnp.where(x >= 0, x, x * jnp.asarray(NEG_SLOPE, x.dtype))


def _sublane_pack(dtype) -> int:
    """Rows per native sublane tile: 8 for 4-byte dtypes, 16 for 2-byte, 32 for 1-byte."""
    itemsize = jnp.dtype(dtype).itemsize
    if itemsize >= 4:
        return 8
    return 32 // itemsize


def _round_up(a: int, b: int) -> int:
    return -(-a // b) * b


@functools.lru_cache(maxsize=None)
def _vmem_capacity_bytes() -> int:
    """Per-core VMEM capacity (128 MiB on v5e/v6e, 64 MiB on v7x)."""
    try:
        return int(pltpu.get_tpu_info().vmem_capacity_bytes)
    except Exception:
        return 64 * 1024 * 1024  # conservative fallback (v7x-sized)


def qrelu(x: jax.Array, *,
          target_block_bytes: int = 8 * 1024 * 1024,
          donate_input: bool = False) -> jax.Array:
    """Elementwise QReLU (leaky_relu with slope -1.99) via a Pallas TPU kernel.

    Single HBM pass for every shape:
      * n % 128 == 0  -> copy-free reshape to (n//128, 128), row-blocked.
      * otherwise     -> copy-free reshape to (1, n), column-blocked; Pallas
                         masks the partial final block (no pad, no slice).
    Block sizes target ~8 MiB, capped so the 2-array x 2-buffer pipeline stays
    well inside the chip's VMEM (<= ~32-48 MiB footprint, headroom on v7x).
    """
    orig_shape = x.shape
    dtype = x.dtype
    if not jnp.issubdtype(dtype, jnp.floating):
        raise TypeError("qrelu supports floating dtypes only "
                        "(slope -1.99 would silently truncate for integer dtypes)")

    n = x.size
    if n == 0:
        return x

    pack = _sublane_pack(dtype)
    itemsize = jnp.dtype(dtype).itemsize

    # --- per-generation VMEM budgeting -------------------------------------
    vmem_cap = _vmem_capacity_bytes()
    # Budget for the pipelined buffers (2 arrays x 2 buffers), leaving headroom.
    pipeline_budget = min(vmem_cap // 2, 48 * 1024 * 1024)
    block_bytes = max(_LANES * pack * itemsize,
                      min(target_block_bytes, pipeline_budget // 4))
    vmem_limit = int(min(vmem_cap * 3 // 4, 96 * 1024 * 1024))

    if n % _LANES == 0:
        # Fast path: reshape only. Row count need NOT be pack-aligned — the
        # pack-aligned block is masked on the partial last row-block.
        rows = n // _LANES
        x_in = x.reshape(rows, _LANES)
        out_shape_2d = (rows, _LANES)

        tr_max = max(pack, (block_bytes // (_LANES * itemsize)) // pack * pack)
        if rows > pack:
            # Guarantee >= 2 grid steps so v7x's second TensorCore gets work.
            tr = min(tr_max, _round_up(-(-rows // 2), pack))
        else:
            tr = rows  # single tile; block dims equal the full array dims
        grid = (pl.cdiv(rows, tr),)
        in_spec = pl.BlockSpec((tr, _LANES), lambda i: (i, 0))
        out_spec = pl.BlockSpec((tr, _LANES), lambda i: (i, 0))
    else:
        # Truly ragged: view as a (1, n) slab and tile along the lane dim.
        # One HBM pass; the partial final lane-block is masked by Pallas.
        x_in = x.reshape(1, n)
        out_shape_2d = (1, n)

        # A (1, bc) block occupies up to `pack` sublane rows in VMEM (native
        # tiling), so budget VMEM with that factor included.
        bc_max = max(_LANES,
                     (pipeline_budget // (4 * pack * itemsize)) // _LANES * _LANES)
        if n > _LANES:
            bc = min(bc_max, _round_up(-(-n // 2), _LANES))  # >= 2 grid steps
        else:
            bc = n  # block equals full array dims
        grid = (pl.cdiv(n, bc),)
        in_spec = pl.BlockSpec((1, bc), lambda i: (0, i))
        out_spec = pl.BlockSpec((1, bc), lambda i: (0, i))

    out2d = pl.pallas_call(
        _qrelu_kernel,
        out_shape=jax.ShapeDtypeStruct(out_shape_2d, dtype),
        grid_spec=pltpu.PrefetchScalarGridSpec(
            num_scalar_prefetch=0,
            grid=grid,
            in_specs=[in_spec],
            out_specs=out_spec,
        ),
        compiler_params=pltpu.CompilerParams(
            # "parallel" shards the 1-D grid across v7x's 2 TensorCores;
            # harmless no-op on single-TC v5e/v6e.
            dimension_semantics=("parallel",),
            vmem_limit_bytes=vmem_limit,
        ),
        cost_estimate=pl.CostEstimate(
            flops=2 * n, transcendentals=0, bytes_accessed=2 * n * itemsize),
        # Alias input->output only when the caller actually donates x;
        # otherwise XLA would insert a defensive copy.
        input_output_aliases=({0: 0} if donate_input else {}),
    )(x_in)

    return out2d.reshape(orig_shape)


def qrelu_ref(x: jax.Array) -> jax.Array:
    """Pure-JAX reference (matches F.leaky_relu(x, 0.01 - 2))."""
    return jnp.where(x >= 0, x, x * jnp.asarray(NEG_SLOPE, x.dtype))


if __name__ == "__main__":
    key = jax.random.PRNGKey(0)
    k0, k1, k2, k3 = jax.random.split(key, 4)

    # Main case: NCHW f32 conv activation. n = 2048 -> fast path; with the
    # >=2-grid-step rule this runs as grid=(2,) of (8, 128) blocks.
    x = jax.random.normal(k0, (2, 4, 16, 16), dtype=jnp.float32)
    out = jax.block_until_ready(qrelu(x))
    assert out.shape == x.shape and out.dtype == x.dtype
    assert jnp.allclose(out, qrelu_ref(x), atol=1e-6, rtol=1e-6), "f32 fast-path mismatch"

    # 128-aligned but not pack-aligned: n = 1536 -> rows = 12 (not multiple of 8).
    # Exercises the relaxed fast-path gate + masked partial last row-block.
    xa = jax.random.normal(k1, (2, 4, 16, 12), dtype=jnp.float32)
    outa = jax.block_until_ready(qrelu(xa))
    assert outa.shape == xa.shape and outa.dtype == xa.dtype
    assert jnp.allclose(outa, qrelu_ref(xa), atol=1e-6, rtol=1e-6), "row-ragged mismatch"

    # Truly ragged: 3*5*7*11 = 1155 elements -> (1, n) column-blocked path,
    # single HBM pass, no pad / no trailing slice.
    xr = jax.random.normal(k2, (3, 5, 7, 11), dtype=jnp.float32)
    outr = jax.block_until_ready(qrelu(xr))
    assert outr.shape == xr.shape and outr.dtype == xr.dtype
    assert jnp.allclose(outr, qrelu_ref(xr), atol=1e-6, rtol=1e-6), "ragged mismatch"

    # bf16 case: checks dtype-aware sublane packing (16-row pack) end-to-end.
    xb = jax.random.normal(k3, (2, 4, 16, 16), dtype=jnp.bfloat16)
    outb = jax.block_until_ready(qrelu(xb))
    assert outb.shape == xb.shape and outb.dtype == xb.dtype
    assert jnp.allclose(outb.astype(jnp.float32),
                        qrelu_ref(xb).astype(jnp.float32),
                        atol=1e-2, rtol=1e-2), "bf16 mismatch"

    print("KERNEL_OK")
</pallas_src>

<mosaic_0001>
module attributes {stable_mosaic.version = 11 : i64} {
  func.func @_qrelu_kernel(%arg0: i32, %arg1: memref<8x128xf32, #tpu.memory_space<vmem>>, %arg2: memref<8x128xf32, #tpu.memory_space<vmem>>) attributes {dimension_semantics = [#tpu.dimension_semantics<parallel>], iteration_bounds = array<i64: 2>, scalar_prefetch = 0 : i64, scratch_operands = 0 : i64, tpu.core_type = #tpu.core_type<tc>, window_params = [{transform_indices = @transform_0, window_bounds = array<i64: 8, 128>}, {transform_indices = @transform_1, window_bounds = array<i64: 8, 128>}]} {
    %c0 = arith.constant 0 : index
    %c0_0 = arith.constant 0 : index
    %0 = vector.load %arg1[%c0, %c0_0] : memref<8x128xf32, #tpu.memory_space<vmem>>, vector<8x128xf32>
    %cst = arith.constant 0.000000e+00 : f32
    %1 = vector.broadcast %cst : f32 to vector<8x128xf32>
    %2 = arith.cmpf oge, %0, %1 : vector<8x128xf32>
    %cst_1 = arith.constant -1.990000e+00 : f32
    %3 = vector.broadcast %cst_1 : f32 to vector<8x128xf32>
    %4 = arith.mulf %0, %3 : vector<8x128xf32>
    %5 = arith.select %2, %0, %4 : vector<8x128xi1>, vector<8x128xf32>
    %c0_2 = arith.constant 0 : index
    %c0_3 = arith.constant 0 : index
    %6 = vector.load %arg2[%c0_2, %c0_3] : memref<8x128xf32, #tpu.memory_space<vmem>>, vector<8x128xf32>
    tpu.vector_store %arg2[%c0_2, %c0_3], %5 {strides = array<i32>} : memref<8x128xf32, #tpu.memory_space<vmem>>, vector<8x128xf32>,
    return
  }
  func.func @transform_0(%arg0: i32) -> (i32, i32) {
    %c0_i32 = arith.constant 0 : i32
    %c0_i32_0 = arith.constant 0 : i32
    return %arg0, %c0_i32 : i32, i32
  }
  func.func @transform_1(%arg0: i32) -> (i32, i32) {
    %c0_i32 = arith.constant 0 : i32
    %c0_i32_0 = arith.constant 0 : i32
    return %arg0, %c0_i32 : i32, i32
  }
}

</mosaic_0001>

<llo_original>
// kernel: tpu_custom_call.1
$region0: #{tpu_custom_call.1}
  #allocation0 [shape = 'u32[]', space=smem, size = 0x4, offset = 0x4, fixed_abs, tag = 'smem constant byte address 0x4 - core index']
  #allocation1 [shape = 'u32[144,128]{1,0:T(1,128)}', space=vmem, size = 0x12000, scoped, tag = 'internal scratch']
  %s0 = inlined_call_operand.hbm [shape: f32[16,128], index: 0, kind: input, shape index: {}]
  %s1 = inlined_call_operand.hbm [shape: f32[16,128], index: 1, kind: output, shape index: {}]
  %s2 = sld [smem:[#allocation0]]
  $region41: #{tpu_custom_call.1} parent=0
    _
  %s4 = ssub.s32 1, %s2
  %s5 = scalar_select 0, %s4, %s2
  $region1: #{tpu_custom_call.1} parent=0
    #allocation2 [shape = 'u8[8192]{0}', space=vmem, size = 0x2000, scoped, tag = 'input window, operand 0']
    #allocation3 [shape = 's32[2]{0}', space=sflag, size = 0x8, scoped, tag = 'scoped memory for tpu_custom_call.1']
    #allocation4 [shape = 's32[2]{0}', space=sflag, size = 0x8, scoped, tag = 'scoped memory for tpu_custom_call.1']
    #allocation5 [shape = 'u8[8192]{0}', space=vmem, size = 0x2000, scoped, tag = 'output window, operand 0']
    %6 = vsyncpa [#allocation3], 0
    %s7 = scalar_lea.sflag [#allocation3], 1
    %8 = vsyncpa %s7, 0
    %9 = vsyncpa [#allocation4], 0
    %s10 = scalar_lea.sflag [#allocation4], 1
    %11 = vsyncpa %s10, 0
    loop: start=0, step=1, limit=4
    $region2: #{tpu_custom_call.1} parent=1 // loop_pre_header
      _
    $region3: #{tpu_custom_call.1} parent=1 // loop_header
      %s13 = sphi 0, %s17
      %p14 = scmp.ge.s32.totalorder %s13, 4
      %s23 = sphi 0, %s25
      %s26 = sphi 0, %s23
      %s27 = sphi 0, %s26
      %s43 = sphi 0, %s27
      %s49 = sphi 0, %s51
      %s52 = sphi 0, %s49
      %s53 = sphi 0, %s52
      %s69 = sphi 0, %s53
    $region4: #{tpu_custom_call.1} parent=1 // loop_header_branch
      %16 = sbr.rel (%p14) target = $region8
    $region5: #{tpu_custom_call.1} parent=1 // loop_body
      %s18 = ssub.s32 %s13, 1
      %s19 = ssub.s32 %s13, 2
      %s20 = sadd.s32 %s13, 1
      %s21 = ssub.s32 %s13, %s20
      %p22 = scmp.eq.s32.totalorder %s21, 0
      %s24 = sadd.s32 %s23, 1
      %s25 = scalar_select %p22, %s23, %s24
      %p28 = pneg %p22
      %p29 = scmp.eq.s32.totalorder %s13, 1
      %p30 = por %p28, %p29
      %p31 = scmp.ne.s32.totalorder %s23, %s26
      %p32 = scmp.eq.s32.totalorder %s13, 0
      %p33 = por %p31, %p32
      %p34 = scmp.ne.s32.totalorder %s23, %s26
      %p35 = scmp.eq.s32.totalorder %s18, 1
      %p36 = por %p34, %p35
      %p37 = scmp.ne.s32.totalorder %s26, %s27
      %p38 = scmp.eq.s32.totalorder %s18, 0
      %p39 = por %p37, %p38
      %p40 = scmp.ne.s32.totalorder %s26, %s27
      %p41 = scmp.eq.s32.totalorder %s19, 1
      %p42 = por %p40, %p41
      %p44 = scmp.ne.s32.totalorder %s27, %s43
      %p45 = scmp.eq.s32.totalorder %s19, 0
      %p46 = por %p44, %p45
      %s47 = ssub.s32 %s13, %s20
      %p48 = scmp.eq.s32.totalorder %s47, 0
      %s50 = sadd.s32 %s49, 1
      %s51 = scalar_select %p48, %s49, %s50
      %p54 = pneg %p48
      %p55 = scmp.eq.s32.totalorder %s13, 1
      %p56 = por %p54, %p55
      %p57 = scmp.ne.s32.totalorder %s49, %s52
      %p58 = scmp.eq.s32.totalorder %s13, 0
      %p59 = por %p57, %p58
      %p60 = scmp.ne.s32.totalorder %s49, %s52
      %p61 = scmp.eq.s32.totalorder %s18, 1
      %p62 = por %p60, %p61
      %p63 = scmp.ne.s32.totalorder %s52, %s53
      %p64 = scmp.eq.s32.totalorder %s18, 0
      %p65 = por %p63, %p64
      %p66 = scmp.ne.s32.totalorder %s52, %s53
      %p67 = scmp.eq.s32.totalorder %s19, 1
      %p68 = por %p66, %p67
      %p70 = scmp.ne.s32.totalorder %s53, %s69
      %p71 = scmp.eq.s32.totalorder %s19, 0
      %p72 = por %p70, %p71
      %p73 = scmp.le.s32.totalorder 1, %s13
      %p74 = scmp.lt.s32.totalorder %s13, 3
      %p75 = pnand %p73, %p74
      %p76 = pneg %p75
      // Predicated region
      $region9: #{tpu_custom_call.1} parent=5 // pred_check
        _
      $region10: #{tpu_custom_call.1} parent=5 // pred_check_branch
        %78 = sbr.rel (%p75) target = $region12
      $region11: #{tpu_custom_call.1} parent=5 // pred_region
        %s79 = ssub.s32 %s13, 1
      $region12: #{tpu_custom_call.1} parent=5 // pred_fallthru
        _
      %p80 = scmp.lt.s32.totalorder %s13, 2
      // Predicated region
      $region13: #{tpu_custom_call.1} parent=5 // pred_check
        %p81 = pneg %p80
      $region14: #{tpu_custom_call.1} parent=5 // pred_check_branch
        %83 = sbr.rel (%p81) target = $region16
      $region15: #{tpu_custom_call.1} parent=5 // pred_region
        // Predicated region
        $region17: #{tpu_custom_call.1} parent=15 // pred_check
          %p84 = pneg %p33
        $region18: #{tpu_custom_call.1} parent=15 // pred_check_branch
          %86 = sbr.rel (%p84) target = $region20
        $region19: #{tpu_custom_call.1} parent=15 // pred_region
          %s87 = sand.u32 %s23, 1
          %s88 = scalar_lea.sflag [#allocation3], %s87
          %s89 = sand.u32 %s23, 1
          %s90 = smul.addr %s89, 8
          %s91 = scalar_lea.vmem [#allocation2], %s90
          %s93 = ssub.s32 128, 128
          %94 = vsyncadd %s88, %s93
          %s95 = smul.addr %s13, 128
          %s96 = scalar_lea.hbm %s0, %s95
          %s98 = sshll.u32 %s91, 4
          %s99 = int_to_ptr.vmem [resolvable:$true] %s98
          %101 = dma.hbm_to_vmem [thread:$0]  %s96, 128, %s99, %s88
        $region20: #{tpu_custom_call.1} parent=15 // pred_fallthru
          _
      $region16: #{tpu_custom_call.1} parent=5 // pred_fallthru
        _
      %p102 = scmp.le.s32.totalorder 1, %s13
      %p103 = scmp.lt.s32.totalorder %s13, 3
      %p104 = pnand %p102, %p103
      %p105 = pneg %p104
      // Predicated region
      $region21: #{tpu_custom_call.1} parent=5 // pred_check
        _
      $region22: #{tpu_custom_call.1} parent=5 // pred_check_branch
        %107 = sbr.rel (%p104) target = $region24
      $region23: #{tpu_custom_call.1} parent=5 // pred_region
        %s108 = ssub.s32 %s13, 1
        %s109 = sand.u32 %s26, 1
        %s110 = scalar_lea.sflag [#allocation3], %s109
        %s111 = sand.u32 %s26, 1
        %s112 = smul.addr %s111, 8
        %s113 = scalar_lea.vmem [#allocation2], %s112
        // Predicated region
        $region25: #{tpu_custom_call.1} parent=23 // pred_check
          %p114 = pneg %p39
        $region26: #{tpu_custom_call.1} parent=23 // pred_check_branch
          %116 = sbr.rel (%p114) target = $region28
        $region27: #{tpu_custom_call.1} parent=23 // pred_region
          %117 = dma.done %s110, 128
        $region28: #{tpu_custom_call.1} parent=23 // pred_fallthru
          _
        %s118 = sand.u32 %s26, 1
        %s119 = scalar_lea.sflag [#allocation3], %s118
        %s120 = sand.u32 %s26, 1
        %s121 = smul.addr %s120, 8
        %s122 = scalar_lea.vmem [#allocation2], %s121
        %p123 = pneg %p39
        %p124 = pneg %p36
        %p125 = pneg %p65
        %p126 = pneg %p62
        %s127 = sand.u32 %s52, 1
        %s128 = scalar_lea.sflag [#allocation4], %s127
        %s129 = sand.u32 %s52, 1
        %s130 = smul.addr %s129, 8
        %s131 = scalar_lea.vmem [#allocation5], %s130
        %v132 = vld [vmem:[%s113] sm:$0xff]
        %vm133 = vcmp.ge.f32.partialorder %v132, 0.0
        %v134 = vmul.f32 %v132, -1.99
        %v135 = vsel %vm133, %v132, %v134
        %136 = vst [vmem:[%s131] sm:$0xff] %v135
        %s137 = sand.u32 %s52, 1
        %s138 = scalar_lea.sflag [#allocation4], %s137
        %s139 = sand.u32 %s52, 1
        %s140 = smul.addr %s139, 8
        %s141 = scalar_lea.vmem [#allocation5], %s140
        // Predicated region
        $region29: #{tpu_custom_call.1} parent=23 // pred_check
          %p142 = pneg %p62
        $region30: #{tpu_custom_call.1} parent=23 // pred_check_branch
          %144 = sbr.rel (%p142) target = $region32
        $region31: #{tpu_custom_call.1} parent=23 // pred_region
          %s146 = ssub.s32 128, 128
          %147 = vsyncadd %s138, %s146
          %s148 = smul.addr %s18, 128
          %s149 = scalar_lea.hbm %s1, %s148
          %s151 = sshll.u32 %s141, 4
          %s152 = int_to_ptr.vmem [resolvable:$true] %s151
          %154 = dma.vmem_to_hbm [thread:$0]  %s152, 128, %s149, %s138
        $region32: #{tpu_custom_call.1} parent=23 // pred_fallthru
          _
      $region24: #{tpu_custom_call.1} parent=5 // pred_fallthru
        _
      %p155 = scmp.le.s32.totalorder 2, %s13
      // Predicated region
      $region33: #{tpu_custom_call.1} parent=5 // pred_check
        %p156 = pneg %p155
      $region34: #{tpu_custom_call.1} parent=5 // pred_check_branch
        %158 = sbr.rel (%p156) target = $region36
      $region35: #{tpu_custom_call.1} parent=5 // pred_region
        %s159 = ssub.s32 %s13, 2
        // Predicated region
        $region37: #{tpu_custom_call.1} parent=35 // pred_check
          %p160 = pneg %p68
        $region38: #{tpu_custom_call.1} parent=35 // pred_check_branch
          %162 = sbr.rel (%p160) target = $region40
        $region39: #{tpu_custom_call.1} parent=35 // pred_region
          %s163 = sand.u32 %s53, 1
          %s164 = scalar_lea.sflag [#allocation4], %s163
          %s165 = sand.u32 %s53, 1
          %s166 = smul.addr %s165, 8
          %s167 = scalar_lea.vmem [#allocation5], %s166
          %168 = dma.done %s164, 128
        $region40: #{tpu_custom_call.1} parent=35 // pred_fallthru
          _
      $region36: #{tpu_custom_call.1} parent=5 // pred_fallthru
        _
    $region6: #{tpu_custom_call.1} parent=1 // loop_footer
      %s17 = sadd.s32 1, %s13
    $region7: #{tpu_custom_call.1} parent=1 // loop_footer_branch
      %12 = sbr.rel target = $region3
    $region8: #{tpu_custom_call.1} parent=1 // loop_exit
      _
    %169 = vsyncpa [#allocation3], 1
    %s170 = scalar_lea.sflag [#allocation3], 1
    %171 = vsyncpa %s170, 1
    %172 = vsyncpa [#allocation4], 1
    %s173 = scalar_lea.sflag [#allocation4], 1
    %174 = vsyncpa %s173, 1

</llo_original>
